<compile_context>
chip_gen: v6e
topology: v6e:2x2x1
jax: 0.10.0
libtpu: 0.0.40
codegen_flags: <defaults>
</compile_context>

<pallas_src>
import functools

import jax
import jax.numpy as jnp
from jax.experimental import pallas as pl
from jax.experimental.pallas import tpu as pltpu


def _blcd_kernel(yi_rows_ref, yit_rows_ref, yi_full_ref, out_ref,
                 yi_fn_ref, e1_acc_ref, e2_acc_ref, *, t, m, K):
    """Processes one tile of TM query rows against all N candidate rows."""
    pid = pl.program_id(0)
    n_tiles = pl.num_programs(0)
    TM, D = yi_rows_ref.shape
    N = yi_full_ref.shape[0]
    f32 = jnp.float32
    eps = jnp.float32(1e-12)
    inf = jnp.float32(jnp.inf)

    # --- first tile: cache L2-normalised candidate rows, zero accumulators ---
    @pl.when(pid == 0)
    def _():
        yf = yi_full_ref[...].astype(f32)
        yi_fn_ref[...] = yf / jnp.sqrt(jnp.sum(yf * yf, axis=-1, keepdims=True) + eps)
        e1_acc_ref[...] = jnp.zeros_like(e1_acc_ref)
        e2_acc_ref[...] = jnp.zeros_like(e2_acc_ref)

    # --- L2-normalise this tile's rows (matches y / sqrt(sum(y**2)+1e-12)) ---
    yr = yi_rows_ref[...].astype(f32)
    ytr = yit_rows_ref[...].astype(f32)
    yi_rn = yr / jnp.sqrt(jnp.sum(yr * yr, axis=-1, keepdims=True) + eps)
    yit_rn = ytr / jnp.sqrt(jnp.sum(ytr * ytr, axis=-1, keepdims=True) + eps)
    yi_fn = yi_fn_ref[...]                                      # (N, D) unit rows

    # --- squared pairwise distances via the Gram identity (MXU matmuls) ------
    dimn = (((1,), (1,)), ((), ()))                             # contract on D
    g = jax.lax.dot_general(yi_rn, yi_fn, dimn, preferred_element_type=f32)
    gt = jax.lax.dot_general(yit_rn, yi_fn, dimn, preferred_element_type=f32)
    d2 = jnp.maximum(2.0 - 2.0 * g, 0.0)                        # (TM, N)
    d2t = jnp.maximum(2.0 - 2.0 * gt, 0.0)                      # (TM, N)

    # Exclude the "self" column (global row id == candidate column id).  This
    # is loss-equivalent to the reference's topk(K+1)[1:] self-discard.
    col_ids = jax.lax.broadcasted_iota(jnp.int32, (TM, N), 1)
    row_ids = jax.lax.broadcasted_iota(jnp.int32, (TM, N), 0) + pid * TM
    d2 = jnp.where(col_ids == row_ids, inf, d2)

    # --- iterative top-K smallest: masked arg-min on squared distances -------
    def body(s, carry):
        masked, e1_vec, dij1 = carry
        minval = jnp.min(masked, axis=-1, keepdims=True)                    # (TM,1)
        # deterministic first-occurrence tie-break
        idx = jnp.min(jnp.where(masked <= minval, col_ids, N),
                      axis=-1, keepdims=True)                               # (TM,1)
        sel = col_ids == idx                                                # (TM,N)
        masked = jnp.where(sel, inf, masked)

        d_ij = 0.5 * jnp.sqrt(minval + eps)                                 # selected dist
        d2t_sel = jnp.sum(jnp.where(sel, d2t, 0.0), axis=-1, keepdims=True)
        d_itj = 0.5 * jnp.sqrt(d2t_sel + eps)

        out1 = (d_ij - d_itj) ** 2 - t
        e1_vec = e1_vec + jnp.where(out1 > 0, out1, 0.0)
        dij1 = jnp.where(s == 0, d_ij, dij1)            # nearest non-self neighbour
        return masked, e1_vec, dij1

    zeros_col = jnp.zeros((TM, 1), f32)
    _, e1_vec, dij1 = jax.lax.fori_loop(0, K, body, (d2, zeros_col, zeros_col))

    # --- second hinge term ----------------------------------------------------
    dv = yi_rn - yit_rn
    d_i_it = 0.5 * jnp.sqrt(jnp.sum(dv * dv, axis=-1, keepdims=True) + eps)  # (TM,1)
    out2 = d_i_it + m - dij1
    e2_vec = jnp.where(out2 > 0, out2, 0.0)

    # accumulate per-row partial sums across tiles (stay vector until the end)
    e1_acc_ref[...] += e1_vec
    e2_acc_ref[...] += e2_vec

    @pl.when(pid == n_tiles - 1)
    def _():
        e1 = jnp.sum(e1_acc_ref[...])
        e2 = jnp.sum(e2_acc_ref[...])
        out_ref[0] = e1 + e2
        out_ref[1] = e1
        out_ref[2] = e2


def _pick_row_tile(n, target=256):
    """Largest tile <= target that divides n and is a multiple of 8 (else n)."""
    if n <= target or n % 8 != 0:
        return n
    for tm in range(target - target % 8, 7, -8):
        if n % tm == 0:
            return tm
    return n


def blcd_loss(yi, yi_t, *, t, m, K, row_tile=None):
    """Returns (e1 + e2, e1, e2) exactly like BLCD_Loss.forward."""
    assert yi.shape == yi_t.shape and yi.ndim == 2
    N, D = yi.shape
    K = int(K)
    assert 1 <= K < N, "BLCD_Loss needs 1 <= K <= N-1"

    TM = int(row_tile) if row_tile is not None else _pick_row_tile(N)
    assert N % TM == 0 and (TM == N or TM % 8 == 0), "row tile must divide N (mult of 8)"
    n_tiles = N // TM

    # VMEM budget: cached normalised candidates + double-buffered row tiles +
    # a generous number of (TM, N) strips (dist matrices, loop temporaries).
    resident_bytes = 4 * (2 * N * D + 8 * TM * D + 16 * TM * N)
    vmem_limit = min(max(resident_bytes, 32 * 1024 * 1024), 64 * 1024 * 1024)

    kernel = functools.partial(_blcd_kernel, t=float(t), m=float(m), K=K)
    out = pl.pallas_call(
        kernel,
        out_shape=jax.ShapeDtypeStruct((3,), jnp.float32),
        grid=(n_tiles,),
        in_specs=[
            pl.BlockSpec((TM, D), lambda i: (i, 0)),   # yi   query-row tile
            pl.BlockSpec((TM, D), lambda i: (i, 0)),   # yi_t query-row tile
            pl.BlockSpec((N, D), lambda i: (0, 0)),    # yi   full candidate set (resident)
        ],
        out_specs=pl.BlockSpec((3,), lambda i: (0,),
                               memory_space=pltpu.MemorySpace.SMEM),
        scratch_shapes=[
            pltpu.VMEM((N, D), jnp.float32),     # cached normalised candidates
            pltpu.VMEM((TM, 1), jnp.float32),    # e1 per-row partial sums
            pltpu.VMEM((TM, 1), jnp.float32),    # e2 per-row partial sums
        ],
        compiler_params=pltpu.CompilerParams(
            # output/scratch accumulate across row tiles -> reduction axis
            dimension_semantics=("arbitrary",),
            vmem_limit_bytes=vmem_limit,
        ),
    )(yi.astype(jnp.float32), yi_t.astype(jnp.float32), yi.astype(jnp.float32))
    return out[0], out[1], out[2]


def _blcd_reference(yi, yi_t, *, t, m, K):
    """Pure-JAX port of the PyTorch forward (for validation)."""
    yi_n = yi / jnp.sqrt(jnp.sum(yi ** 2, -1, keepdims=True) + 1e-12)
    yit_n = yi_t / jnp.sqrt(jnp.sum(yi_t ** 2, -1, keepdims=True) + 1e-12)
    diff = yi_n[:, None, :] - yi_n[None, :, :]
    dist = jnp.sqrt(jnp.sum(diff ** 2, -1) + 1e-12)
    _, idx = jax.lax.top_k(-dist, K + 1)              # K+1 smallest
    nbr = idx[:, 1:]                                  # drop self
    yj = yi_n[nbr]                                    # (N, K, D)
    d_ij = 0.5 * jnp.sqrt(jnp.sum((yi_n[:, None, :] - yj) ** 2, -1) + 1e-12)
    d_itj = 0.5 * jnp.sqrt(jnp.sum((yit_n[:, None, :] - yj) ** 2, -1) + 1e-12)
    out1 = (d_ij - d_itj) ** 2 - t
    e1 = jnp.sum(jnp.where(out1 > 0, out1, 0.0))
    yij = yi_n[nbr[:, 0]]
    d_i_it = 0.5 * jnp.sqrt(jnp.sum((yi_n - yit_n) ** 2, -1) + 1e-12)
    d_i_ij = 0.5 * jnp.sqrt(jnp.sum((yi_n - yij) ** 2, -1) + 1e-12)
    out2 = d_i_it + m - d_i_ij
    e2 = jnp.sum(jnp.where(out2 > 0, out2, 0.0))
    return e1 + e2, e1, e2


if __name__ == "__main__":
    key = jax.random.PRNGKey(0)
    k1, k2 = jax.random.split(key)

    # Small shapes consistent with the module: N samples of dim D, K < N.
    N, D = 64, 32
    K = 16              # module default
    t, m = 0.0025, 0.5

    yi = jax.random.normal(k1, (N, D), dtype=jnp.float32)
    yi_t = yi + 0.3 * jax.random.normal(k2, (N, D), dtype=jnp.float32)

    # row_tile=32 -> 2-tile grid, exercising the cross-tile accumulation path.
    loss, e1, e2 = blcd_loss(yi, yi_t, t=t, m=m, K=K, row_tile=32)
    jax.block_until_ready((loss, e1, e2))

    ref = _blcd_reference(yi, yi_t, t=t, m=m, K=K)
    for got, want in zip((loss, e1, e2), ref):
        assert jnp.allclose(got, want, rtol=5e-2, atol=5e-2), (float(got), float(want))

    print("KERNEL_OK")
</pallas_src>

<mosaic_0001>
module attributes {stable_mosaic.version = 11 : i64} {
  func.func @_blcd_kernel(%arg0: i32, %arg1: memref<32x32xf32, #tpu.memory_space<vmem>>, %arg2: memref<32x32xf32, #tpu.memory_space<vmem>>, %arg3: memref<64x32xf32, #tpu.memory_space<vmem>>, %arg4: memref<3xf32, #tpu.memory_space<smem>>, %arg5: memref<64x32xf32, #tpu.memory_space<vmem>>, %arg6: memref<32x1xf32, #tpu.memory_space<vmem>>, %arg7: memref<32x1xf32, #tpu.memory_space<vmem>>) attributes {dimension_semantics = [#tpu.dimension_semantics<arbitrary>], iteration_bounds = array<i64: 2>, scalar_prefetch = 0 : i64, scratch_operands = 3 : i64, tpu.core_type = #tpu.core_type<tc>, window_params = [{transform_indices = @transform_0, window_bounds = array<i64: 32, 32>}, {transform_indices = @transform_1, window_bounds = array<i64: 32, 32>}, {pipeline_mode = #tpu.pipeline_mode<synchronous>, transform_indices = @transform_2, window_bounds = array<i64: 64, 32>}, {transform_indices = @transform_3, window_bounds = array<i64: 3>}]} {
    %c0_i32 = arith.constant 0 : i32
    %0 = arith.cmpi eq, %arg0, %c0_i32 : i32
    %1 = arith.extui %0 : i1 to i32
    %cst = arith.constant 9.99999996E-13 : f32
    %c0_i32_0 = arith.constant 0 : i32
    %2 = arith.cmpi ne, %1, %c0_i32_0 : i32
    scf.if %2 {
      %c0_40 = arith.constant 0 : index
      %c0_41 = arith.constant 0 : index
      %72 = vector.load %arg3[%c0_40, %c0_41] : memref<64x32xf32, #tpu.memory_space<vmem>>, vector<64x32xf32>
      %73 = arith.mulf %72, %72 : vector<64x32xf32>
      %cst_42 = arith.constant dense<0.000000e+00> : vector<64xf32>
      %74 = vector.multi_reduction <add>, %73, %cst_42 [1] : vector<64x32xf32> to vector<64xf32>
      %75 = vector.shape_cast %74 : vector<64xf32> to vector<64x1xf32>
      %76 = vector.broadcast %cst : f32 to vector<64x1xf32>
      %77 = arith.addf %75, %76 : vector<64x1xf32>
      %78 = math.sqrt %77 : vector<64x1xf32>
      %79 = vector.broadcast %78 : vector<64x1xf32> to vector<64x32xf32>
      %80 = arith.divf %72, %79 : vector<64x32xf32>
      %c0_43 = arith.constant 0 : index
      %c0_44 = arith.constant 0 : index
      %81 = vector.load %arg5[%c0_43, %c0_44] : memref<64x32xf32, #tpu.memory_space<vmem>>, vector<64x32xf32>
      tpu.vector_store %arg5[%c0_43, %c0_44], %80 {strides = array<i32>} : memref<64x32xf32, #tpu.memory_space<vmem>>, vector<64x32xf32>,
      %cst_45 = arith.constant 0.000000e+00 : f32
      %82 = vector.broadcast %cst_45 : f32 to vector<32x1xf32>
      %c0_46 = arith.constant 0 : index
      %c0_47 = arith.constant 0 : index
      %83 = vector.load %arg6[%c0_46, %c0_47] : memref<32x1xf32, #tpu.memory_space<vmem>>, vector<32x1xf32>
      tpu.vector_store %arg6[%c0_46, %c0_47], %82 {strides = array<i32>} : memref<32x1xf32, #tpu.memory_space<vmem>>, vector<32x1xf32>,
      %cst_48 = arith.constant 0.000000e+00 : f32
      %84 = vector.broadcast %cst_48 : f32 to vector<32x1xf32>
      %c0_49 = arith.constant 0 : index
      %c0_50 = arith.constant 0 : index
      %85 = vector.load %arg7[%c0_49, %c0_50] : memref<32x1xf32, #tpu.memory_space<vmem>>, vector<32x1xf32>
      tpu.vector_store %arg7[%c0_49, %c0_50], %84 {strides = array<i32>} : memref<32x1xf32, #tpu.memory_space<vmem>>, vector<32x1xf32>,
    } else {
    }
    %c0 = arith.constant 0 : index
    %c0_1 = arith.constant 0 : index
    %3 = vector.load %arg1[%c0, %c0_1] : memref<32x32xf32, #tpu.memory_space<vmem>>, vector<32x32xf32>
    %c0_2 = arith.constant 0 : index
    %c0_3 = arith.constant 0 : index
    %4 = vector.load %arg2[%c0_2, %c0_3] : memref<32x32xf32, #tpu.memory_space<vmem>>, vector<32x32xf32>
    %5 = arith.mulf %3, %3 : vector<32x32xf32>
    %cst_4 = arith.constant dense<0.000000e+00> : vector<32xf32>
    %6 = vector.multi_reduction <add>, %5, %cst_4 [1] : vector<32x32xf32> to vector<32xf32>
    %7 = vector.shape_cast %6 : vector<32xf32> to vector<32x1xf32>
    %cst_5 = arith.constant 9.99999996E-13 : f32
    %8 = vector.broadcast %cst_5 : f32 to vector<32x1xf32>
    %9 = arith.addf %7, %8 : vector<32x1xf32>
    %10 = math.sqrt %9 : vector<32x1xf32>
    %11 = vector.broadcast %10 : vector<32x1xf32> to vector<32x32xf32>
    %12 = arith.divf %3, %11 : vector<32x32xf32>
    %13 = arith.mulf %4, %4 : vector<32x32xf32>
    %cst_6 = arith.constant dense<0.000000e+00> : vector<32xf32>
    %14 = vector.multi_reduction <add>, %13, %cst_6 [1] : vector<32x32xf32> to vector<32xf32>
    %15 = vector.shape_cast %14 : vector<32xf32> to vector<32x1xf32>
    %cst_7 = arith.constant 9.99999996E-13 : f32
    %16 = vector.broadcast %cst_7 : f32 to vector<32x1xf32>
    %17 = arith.addf %15, %16 : vector<32x1xf32>
    %18 = math.sqrt %17 : vector<32x1xf32>
    %19 = vector.broadcast %18 : vector<32x1xf32> to vector<32x32xf32>
    %20 = arith.divf %4, %19 : vector<32x32xf32>
    %c0_8 = arith.constant 0 : index
    %c0_9 = arith.constant 0 : index
    %21 = vector.load %arg5[%c0_8, %c0_9] : memref<64x32xf32, #tpu.memory_space<vmem>>, vector<64x32xf32>
    %cst_10 = arith.constant dense<0.000000e+00> : vector<32x64xf32>
    %22 = tpu.matmul %12, %21, %cst_10 {dimension_numbers = #tpu.dot_dimension_numbers<[1], [1], [0], [0], [0, 0, 1, 0], [], []>} : vector<32x32xf32>, vector<64x32xf32>, vector<32x64xf32> -> vector<32x64xf32>
    %cst_11 = arith.constant dense<0.000000e+00> : vector<32x64xf32>
    %23 = tpu.matmul %20, %21, %cst_11 {dimension_numbers = #tpu.dot_dimension_numbers<[1], [1], [0], [0], [0, 0, 1, 0], [], []>} : vector<32x32xf32>, vector<64x32xf32>, vector<32x64xf32> -> vector<32x64xf32>
    %cst_12 = arith.constant 2.000000e+00 : f32
    %24 = vector.broadcast %cst_12 : f32 to vector<32x64xf32>
    %25 = arith.mulf %24, %22 : vector<32x64xf32>
    %cst_13 = arith.constant 2.000000e+00 : f32
    %26 = vector.broadcast %cst_13 : f32 to vector<32x64xf32>
    %27 = arith.subf %26, %25 : vector<32x64xf32>
    %cst_14 = arith.constant 0.000000e+00 : f32
    %28 = vector.broadcast %cst_14 : f32 to vector<32x64xf32>
    %29 = arith.maximumf %27, %28 : vector<32x64xf32>
    %cst_15 = arith.constant 2.000000e+00 : f32
    %30 = vector.broadcast %cst_15 : f32 to vector<32x64xf32>
    %31 = arith.mulf %30, %23 : vector<32x64xf32>
    %cst_16 = arith.constant 2.000000e+00 : f32
    %32 = vector.broadcast %cst_16 : f32 to vector<32x64xf32>
    %33 = arith.subf %32, %31 : vector<32x64xf32>
    %cst_17 = arith.constant 0.000000e+00 : f32
    %34 = vector.broadcast %cst_17 : f32 to vector<32x64xf32>
    %35 = arith.maximumf %33, %34 : vector<32x64xf32>
    %36 = tpu.iota {dimensions = array<i32: 1>} : vector<32x64xi32>
    %37 = tpu.iota {dimensions = array<i32: 0>} : vector<32x64xi32>
    %c32_i32 = arith.constant 32 : i32
    %38 = arith.muli %arg0, %c32_i32 : i32
    %39 = vector.broadcast %38 : i32 to vector<32x64xi32>
    %40 = arith.addi %37, %39 : vector<32x64xi32>
    %41 = arith.cmpi eq, %36, %40 : vector<32x64xi32>
    %cst_18 = arith.constant 0x7F800000 : f32
    %42 = vector.broadcast %cst_18 : f32 to vector<32x64xf32>
    %43 = arith.select %41, %42, %29 : vector<32x64xi1>, vector<32x64xf32>
    %cst_19 = arith.constant 0.000000e+00 : f32
    %44 = vector.broadcast %cst_19 : f32 to vector<32x1xf32>
    %cst_20 = arith.constant 0x7F800000 : f32
    %cst_21 = arith.constant 9.99999996E-13 : f32
    %c0_i32_22 = arith.constant 0 : i32
    %c16_i32 = arith.constant 16 : i32
    %45 = arith.addi %c0_i32_22, %c16_i32 : i32
    %c1_i32 = arith.constant 1 : i32
    %46:3 = scf.for %arg8 = %c0_i32_22 to %45 step %c1_i32 iter_args(%arg9 = %43, %arg10 = %44, %arg11 = %44) -> (vector<32x64xf32>, vector<32x1xf32>, vector<32x1xf32>)  : i32 {
      %cst_40 = arith.constant dense<0x7F800000> : vector<32xf32>
      %72 = vector.multi_reduction <minimumf>, %arg9, %cst_40 [1] : vector<32x64xf32> to vector<32xf32>
      %73 = vector.shape_cast %72 : vector<32xf32> to vector<32x1xf32>
      %74 = vector.broadcast %73 : vector<32x1xf32> to vector<32x64xf32>
      %75 = arith.cmpf ole, %arg9, %74 : vector<32x64xf32>
      %c64_i32 = arith.constant 64 : i32
      %76 = vector.broadcast %c64_i32 : i32 to vector<32x64xi32>
      %77 = arith.select %75, %36, %76 : vector<32x64xi1>, vector<32x64xi32>
      %cst_41 = arith.constant dense<2147483647> : vector<32xi32>
      %78 = vector.multi_reduction <minsi>, %77, %cst_41 [1] : vector<32x64xi32> to vector<32xi32>
      %79 = vector.shape_cast %78 : vector<32xi32> to vector<32x1xi32>
      %80 = vector.broadcast %79 : vector<32x1xi32> to vector<32x64xi32>
      %81 = arith.cmpi eq, %36, %80 : vector<32x64xi32>
      %82 = vector.broadcast %cst_20 : f32 to vector<32x64xf32>
      %83 = arith.select %81, %82, %arg9 : vector<32x64xi1>, vector<32x64xf32>
      %84 = vector.broadcast %cst_21 : f32 to vector<32x1xf32>
      %85 = arith.addf %73, %84 : vector<32x1xf32>
      %86 = math.sqrt %85 : vector<32x1xf32>
      %cst_42 = arith.constant 5.000000e-01 : f32
      %87 = vector.broadcast %cst_42 : f32 to vector<32x1xf32>
      %88 = arith.mulf %87, %86 : vector<32x1xf32>
      %cst_43 = arith.constant 0.000000e+00 : f32
      %89 = vector.broadcast %cst_43 : f32 to vector<32x64xf32>
      %90 = arith.select %81, %35, %89 : vector<32x64xi1>, vector<32x64xf32>
      %cst_44 = arith.constant dense<0.000000e+00> : vector<32xf32>
      %91 = vector.multi_reduction <add>, %90, %cst_44 [1] : vector<32x64xf32> to vector<32xf32>
      %92 = vector.shape_cast %91 : vector<32xf32> to vector<32x1xf32>
      %93 = vector.broadcast %cst_21 : f32 to vector<32x1xf32>
      %94 = arith.addf %92, %93 : vector<32x1xf32>
      %95 = math.sqrt %94 : vector<32x1xf32>
      %cst_45 = arith.constant 5.000000e-01 : f32
      %96 = vector.broadcast %cst_45 : f32 to vector<32x1xf32>
      %97 = arith.mulf %96, %95 : vector<32x1xf32>
      %98 = arith.subf %88, %97 : vector<32x1xf32>
      %99 = arith.mulf %98, %98 : vector<32x1xf32>
      %cst_46 = arith.constant 2.500000e-03 : f32
      %100 = vector.broadcast %cst_46 : f32 to vector<32x1xf32>
      %101 = arith.subf %99, %100 : vector<32x1xf32>
      %cst_47 = arith.constant 0.000000e+00 : f32
      %102 = vector.broadcast %cst_47 : f32 to vector<32x1xf32>
      %103 = arith.cmpf ogt, %101, %102 : vector<32x1xf32>
      %cst_48 = arith.constant 0.000000e+00 : f32
      %104 = vector.broadcast %cst_48 : f32 to vector<32x1xf32>
      %105 = arith.select %103, %101, %104 : vector<32x1xi1>, vector<32x1xf32>
      %106 = arith.addf %arg10, %105 : vector<32x1xf32>
      %c0_i32_49 = arith.constant 0 : i32
      %107 = arith.cmpi eq, %arg8, %c0_i32_49 : i32
      %108 = arith.select %107, %88, %arg11 : vector<32x1xf32>
      scf.yield %83, %106, %108 : vector<32x64xf32>, vector<32x1xf32>, vector<32x1xf32>
    }
    %c16_i32_23 = arith.constant 16 : i32
    %47 = arith.subf %12, %20 : vector<32x32xf32>
    %48 = arith.mulf %47, %47 : vector<32x32xf32>
    %cst_24 = arith.constant dense<0.000000e+00> : vector<32xf32>
    %49 = vector.multi_reduction <add>, %48, %cst_24 [1] : vector<32x32xf32> to vector<32xf32>
    %50 = vector.shape_cast %49 : vector<32xf32> to vector<32x1xf32>
    %cst_25 = arith.constant 9.99999996E-13 : f32
    %51 = vector.broadcast %cst_25 : f32 to vector<32x1xf32>
    %52 = arith.addf %50, %51 : vector<32x1xf32>
    %53 = math.sqrt %52 : vector<32x1xf32>
    %cst_26 = arith.constant 5.000000e-01 : f32
    %54 = vector.broadcast %cst_26 : f32 to vector<32x1xf32>
    %55 = arith.mulf %54, %53 : vector<32x1xf32>
    %cst_27 = arith.constant 5.000000e-01 : f32
    %56 = vector.broadcast %cst_27 : f32 to vector<32x1xf32>
    %57 = arith.addf %55, %56 : vector<32x1xf32>
    %58 = arith.subf %57, %46#2 : vector<32x1xf32>
    %cst_28 = arith.constant 0.000000e+00 : f32
    %59 = vector.broadcast %cst_28 : f32 to vector<32x1xf32>
    %60 = arith.cmpf ogt, %58, %59 : vector<32x1xf32>
    %cst_29 = arith.constant 0.000000e+00 : f32
    %61 = vector.broadcast %cst_29 : f32 to vector<32x1xf32>
    %62 = arith.select %60, %58, %61 : vector<32x1xi1>, vector<32x1xf32>
    %c0_30 = arith.constant 0 : index
    %c0_31 = arith.constant 0 : index
    %63 = vector.load %arg6[%c0_30, %c0_31] : memref<32x1xf32, #tpu.memory_space<vmem>>, vector<32x1xf32>
    %64 = arith.addf %63, %46#1 : vector<32x1xf32>
    %c0_32 = arith.constant 0 : index
    %c0_33 = arith.constant 0 : index
    %65 = vector.load %arg6[%c0_32, %c0_33] : memref<32x1xf32, #tpu.memory_space<vmem>>, vector<32x1xf32>
    tpu.vector_store %arg6[%c0_32, %c0_33], %64 {strides = array<i32>} : memref<32x1xf32, #tpu.memory_space<vmem>>, vector<32x1xf32>,
    %c0_34 = arith.constant 0 : index
    %c0_35 = arith.constant 0 : index
    %66 = vector.load %arg7[%c0_34, %c0_35] : memref<32x1xf32, #tpu.memory_space<vmem>>, vector<32x1xf32>
    %67 = arith.addf %66, %62 : vector<32x1xf32>
    %c0_36 = arith.constant 0 : index
    %c0_37 = arith.constant 0 : index
    %68 = vector.load %arg7[%c0_36, %c0_37] : memref<32x1xf32, #tpu.memory_space<vmem>>, vector<32x1xf32>
    tpu.vector_store %arg7[%c0_36, %c0_37], %67 {strides = array<i32>} : memref<32x1xf32, #tpu.memory_space<vmem>>, vector<32x1xf32>,
    %c1_i32_38 = arith.constant 1 : i32
    %69 = arith.cmpi eq, %arg0, %c1_i32_38 : i32
    %70 = arith.extui %69 : i1 to i32
    %c0_i32_39 = arith.constant 0 : i32
    %71 = arith.cmpi ne, %70, %c0_i32_39 : i32
    scf.if %71 {
      %c0_40 = arith.constant 0 : index
      %c0_41 = arith.constant 0 : index
      %72 = vector.load %arg6[%c0_40, %c0_41] : memref<32x1xf32, #tpu.memory_space<vmem>>, vector<32x1xf32>
      %73 = vector.shape_cast %72 : vector<32x1xf32> to vector<1x32x1xf32>
      %cst_42 = arith.constant dense<0.000000e+00> : vector<1xf32>
      %74 = vector.multi_reduction <add>, %73, %cst_42 [1, 2] : vector<1x32x1xf32> to vector<1xf32>
      %75 = vector.shape_cast %74 : vector<1xf32> to vector<1x1x1xf32>
      %76 = vector.extract %75[0, 0, 0] : f32 from vector<1x1x1xf32>
      %c0_43 = arith.constant 0 : index
      %c0_44 = arith.constant 0 : index
      %77 = vector.load %arg7[%c0_43, %c0_44] : memref<32x1xf32, #tpu.memory_space<vmem>>, vector<32x1xf32>
      %78 = vector.shape_cast %77 : vector<32x1xf32> to vector<1x32x1xf32>
      %cst_45 = arith.constant dense<0.000000e+00> : vector<1xf32>
      %79 = vector.multi_reduction <add>, %78, %cst_45 [1, 2] : vector<1x32x1xf32> to vector<1xf32>
      %80 = vector.shape_cast %79 : vector<1xf32> to vector<1x1x1xf32>
      %81 = vector.extract %80[0, 0, 0] : f32 from vector<1x1x1xf32>
      %82 = arith.addf %76, %81 : f32
      %c0_46 = arith.constant 0 : index
      %83 = memref.load %arg4[%c0_46] : memref<3xf32, #tpu.memory_space<smem>>
      memref.store %82, %arg4[%c0_46] : memref<3xf32, #tpu.memory_space<smem>>
      %c1 = arith.constant 1 : index
      %84 = memref.load %arg4[%c1] : memref<3xf32, #tpu.memory_space<smem>>
      memref.store %76, %arg4[%c1] : memref<3xf32, #tpu.memory_space<smem>>
      %c2 = arith.constant 2 : index
      %85 = memref.load %arg4[%c2] : memref<3xf32, #tpu.memory_space<smem>>
      memref.store %81, %arg4[%c2] : memref<3xf32, #tpu.memory_space<smem>>
    } else {
    }
    return
  }
  func.func @transform_0(%arg0: i32) -> (i32, i32) {
    %c0_i32 = arith.constant 0 : i32
    %c0_i32_0 = arith.constant 0 : i32
    return %arg0, %c0_i32 : i32, i32
  }
  func.func @transform_1(%arg0: i32) -> (i32, i32) {
    %c0_i32 = arith.constant 0 : i32
    %c0_i32_0 = arith.constant 0 : i32
    return %arg0, %c0_i32 : i32, i32
  }
  func.func @transform_2(%arg0: i32) -> (i32, i32) {
    %c0_i32 = arith.constant 0 : i32
    %c0_i32_0 = arith.constant 0 : i32
    %c0_i32_1 = arith.constant 0 : i32
    return %c0_i32, %c0_i32_0 : i32, i32
  }
  func.func @transform_3(%arg0: i32) -> i32 {
    %c0_i32 = arith.constant 0 : i32
    %c0_i32_0 = arith.constant 0 : i32
    return %c0_i32 : i32
  }
}

</mosaic_0001>

<llo_original>
// kernel: tpu_custom_call.1
$region0: #{tpu_custom_call.1}
  #allocation0 [shape = 'u32[]', space=smem, size = 0x4, offset = 0x4, fixed_abs, tag = 'smem constant byte address 0x4 - core index']
  #allocation1 [shape = 'u32[144,128]{1,0:T(1,128)}', space=vmem, size = 0x12000, scoped, tag = 'internal scratch']
  #allocation2 [shape = 'f32[64,32]{1,0:T(8,128)}', space=vmem, size = 0x8000, scoped, tag = 'scratch operand']
  #allocation3 [shape = 'f32[32,1]{1,0:T(8,128)}', space=vmem, size = 0x4000, scoped, tag = 'scratch operand']
  #allocation4 [shape = 'f32[32,1]{1,0:T(8,128)}', space=vmem, size = 0x4000, scoped, tag = 'scratch operand']
  %s0 = inlined_call_operand.vmem [shape: f32[64,32], index: 0, kind: input, shape index: {}]
  %s1 = inlined_call_operand.vmem [shape: f32[64,32], index: 1, kind: input, shape index: {}]
  %s2 = inlined_call_operand.vmem [shape: f32[64,32], index: 2, kind: input, shape index: {}]
  %s3 = inlined_call_operand.hbm [shape: f32[3], index: 3, kind: output, shape index: {}]
  %s4 = sld [smem:[#allocation0]]
  $region60: #{tpu_custom_call.1} parent=0
    _
  %s6 = ssub.s32 1, %s4
  %s7 = scalar_select 0, %s6, %s4
  $region1: #{tpu_custom_call.1} parent=0
    #allocation5 [shape = 'u8[512]{0}', space=smem, size = 0x200, scoped, tag = 'output window, operand 0, single buffered']
    #allocation6 [shape = 's32[2]{0}', space=sflag, size = 0x8, scoped, tag = 'scoped memory for tpu_custom_call.1']
    %8 = vsyncpa [#allocation6], 0
    loop: start=0, step=1, limit=4
    $region2: #{tpu_custom_call.1} parent=1 // loop_pre_header
      _
    $region3: #{tpu_custom_call.1} parent=1 // loop_header
      %s10 = sphi 0, %s14
      %p11 = scmp.ge.s32.totalorder %s10, 4
      %s20 = sphi 0, %s22
      %s23 = sphi 0, %s20
      %s24 = sphi 0, %s23
      %s40 = sphi 0, %s24
      %s46 = sphi 0, %s48
      %s49 = sphi 0, %s46
      %s50 = sphi 0, %s49
      %s66 = sphi 0, %s50
      %s70 = sphi 0, %s70
      %s72 = sphi 0, %s70
      %s73 = sphi 0, %s72
      %s87 = sphi 0, %s73
      %s91 = sphi 0, %s91
      %s93 = sphi 0, %s91
      %s94 = sphi 0, %s93
      %s108 = sphi 0, %s94
    $region4: #{tpu_custom_call.1} parent=1 // loop_header_branch
      %13 = sbr.rel (%p11) target = $region8
    $region5: #{tpu_custom_call.1} parent=1 // loop_body
      %s15 = ssub.s32 %s10, 1
      %s16 = ssub.s32 %s10, 2
      %s17 = sadd.s32 %s10, 1
      %s18 = ssub.s32 %s10, %s17
      %p19 = scmp.eq.s32.totalorder %s18, 0
      %s21 = sadd.s32 %s20, 1
      %s22 = scalar_select %p19, %s20, %s21
      %p25 = pneg %p19
      %p26 = scmp.eq.s32.totalorder %s10, 1
      %p27 = por %p25, %p26
      %p28 = scmp.ne.s32.totalorder %s20, %s23
      %p29 = scmp.eq.s32.totalorder %s10, 0
      %p30 = por %p28, %p29
      %p31 = scmp.ne.s32.totalorder %s20, %s23
      %p32 = scmp.eq.s32.totalorder %s15, 1
      %p33 = por %p31, %p32
      %p34 = scmp.ne.s32.totalorder %s23, %s24
      %p35 = scmp.eq.s32.totalorder %s15, 0
      %p36 = por %p34, %p35
      %p37 = scmp.ne.s32.totalorder %s23, %s24
      %p38 = scmp.eq.s32.totalorder %s16, 1
      %p39 = por %p37, %p38
      %p41 = scmp.ne.s32.totalorder %s24, %s40
      %p42 = scmp.eq.s32.totalorder %s16, 0
      %p43 = por %p41, %p42
      %s44 = ssub.s32 %s10, %s17
      %p45 = scmp.eq.s32.totalorder %s44, 0
      %s47 = sadd.s32 %s46, 1
      %s48 = scalar_select %p45, %s46, %s47
      %p51 = pneg %p45
      %p52 = scmp.eq.s32.totalorder %s10, 1
      %p53 = por %p51, %p52
      %p54 = scmp.ne.s32.totalorder %s46, %s49
      %p55 = scmp.eq.s32.totalorder %s10, 0
      %p56 = por %p54, %p55
      %p57 = scmp.ne.s32.totalorder %s46, %s49
      %p58 = scmp.eq.s32.totalorder %s15, 1
      %p59 = por %p57, %p58
      %p60 = scmp.ne.s32.totalorder %s49, %s50
      %p61 = scmp.eq.s32.totalorder %s15, 0
      %p62 = por %p60, %p61
      %p63 = scmp.ne.s32.totalorder %s49, %s50
      %p64 = scmp.eq.s32.totalorder %s16, 1
      %p65 = por %p63, %p64
      %p67 = scmp.ne.s32.totalorder %s50, %s66
      %p68 = scmp.eq.s32.totalorder %s16, 0
      %p69 = por %p67, %p68
      %s71 = sadd.s32 %s70, 1
      %p74 = scmp.eq.s32.totalorder %s10, 1
      %p75 = scmp.ne.s32.totalorder %s70, %s72
      %p76 = scmp.eq.s32.totalorder %s10, 0
      %p77 = por %p75, %p76
      %p78 = scmp.ne.s32.totalorder %s70, %s72
      %p79 = scmp.eq.s32.totalorder %s15, 1
      %p80 = por %p78, %p79
      %p81 = scmp.ne.s32.totalorder %s72, %s73
      %p82 = scmp.eq.s32.totalorder %s15, 0
      %p83 = por %p81, %p82
      %p84 = scmp.ne.s32.totalorder %s72, %s73
      %p85 = scmp.eq.s32.totalorder %s16, 1
      %p86 = por %p84, %p85
      %p88 = scmp.ne.s32.totalorder %s73, %s87
      %p89 = scmp.eq.s32.totalorder %s16, 0
      %p90 = por %p88, %p89
      %s92 = sadd.s32 %s91, 1
      %p95 = scmp.eq.s32.totalorder %s10, 1
      %p96 = scmp.ne.s32.totalorder %s91, %s93
      %p97 = scmp.eq.s32.totalorder %s10, 0
      %p98 = por %p96, %p97
      %p99 = scmp.ne.s32.totalorder %s91, %s93
      %p100 = scmp.eq.s32.totalorder %s15, 1
      %p101 = por %p99, %p100
      %p102 = scmp.ne.s32.totalorder %s93, %s94
      %p103 = scmp.eq.s32.totalorder %s15, 0
      %p104 = por %p102, %p103
      %p105 = scmp.ne.s32.totalorder %s93, %s94
      %p106 = scmp.eq.s32.totalorder %s16, 1
      %p107 = por %p105, %p106
      %p109 = scmp.ne.s32.totalorder %s94, %s108
      %p110 = scmp.eq.s32.totalorder %s16, 0
      %p111 = por %p109, %p110
      %p112 = scmp.le.s32.totalorder 1, %s10
      %p113 = scmp.lt.s32.totalorder %s10, 3
      %p114 = pnand %p112, %p113
      %p115 = pneg %p114
      // Predicated region
      $region9: #{tpu_custom_call.1} parent=5 // pred_check
        _
      $region10: #{tpu_custom_call.1} parent=5 // pred_check_branch
        %117 = sbr.rel (%p114) target = $region12
      $region11: #{tpu_custom_call.1} parent=5 // pred_region
        %s118 = ssub.s32 %s10, 1
        // Predicated region
        $region13: #{tpu_custom_call.1} parent=11 // pred_check
          %p119 = pneg %p83
        $region14: #{tpu_custom_call.1} parent=11 // pred_check_branch
          %121 = sbr.rel (%p119) target = $region16
        $region15: #{tpu_custom_call.1} parent=11 // pred_region
          _
        $region16: #{tpu_custom_call.1} parent=11 // pred_fallthru
          _
      $region12: #{tpu_custom_call.1} parent=5 // pred_fallthru
        _
      %p122 = scmp.lt.s32.totalorder %s10, 2
      // Predicated region
      $region17: #{tpu_custom_call.1} parent=5 // pred_check
        %p123 = pneg %p122
      $region18: #{tpu_custom_call.1} parent=5 // pred_check_branch
        %125 = sbr.rel (%p123) target = $region20
      $region19: #{tpu_custom_call.1} parent=5 // pred_region
        // Predicated region
        $region21: #{tpu_custom_call.1} parent=19 // pred_check
          %p126 = pneg %p30
        $region22: #{tpu_custom_call.1} parent=19 // pred_check_branch
          %128 = sbr.rel (%p126) target = $region24
        $region23: #{tpu_custom_call.1} parent=19 // pred_region
          %s129 = smul.u32 4, %s10
          %p130 = scmp.lt.s32.totalorder %s129, 7
          %s131 = scalar_select %p130, %s129, 7
          %s132 = smul.addr %s131, 8
          %s133 = scalar_lea.vmem %s0, %s132
          %s134 = smul.u32 4, %s10
        $region24: #{tpu_custom_call.1} parent=19 // pred_fallthru
          _
        // Predicated region
        $region25: #{tpu_custom_call.1} parent=19 // pred_check
          %p135 = pneg %p56
        $region26: #{tpu_custom_call.1} parent=19 // pred_check_branch
          %137 = sbr.rel (%p135) target = $region28
        $region27: #{tpu_custom_call.1} parent=19 // pred_region
          %s138 = smul.u32 4, %s10
          %p139 = scmp.lt.s32.totalorder %s138, 7
          %s140 = scalar_select %p139, %s138, 7
          %s141 = smul.addr %s140, 8
          %s142 = scalar_lea.vmem %s1, %s141
          %s143 = smul.u32 4, %s10
        $region28: #{tpu_custom_call.1} parent=19 // pred_fallthru
          _
      $region20: #{tpu_custom_call.1} parent=5 // pred_fallthru
        _
      %p144 = scmp.le.s32.totalorder 1, %s10
      %p145 = scmp.lt.s32.totalorder %s10, 3
      %p146 = pnand %p144, %p145
      %p147 = pneg %p146
      // Predicated region
      $region29: #{tpu_custom_call.1} parent=5 // pred_check
        _
      $region30: #{tpu_custom_call.1} parent=5 // pred_check_branch
        %149 = sbr.rel (%p146) target = $region32
      $region31: #{tpu_custom_call.1} parent=5 // pred_region
        %s150 = ssub.s32 %s10, 1
        %s151 = smul.u32 4, %s15
        %p152 = scmp.lt.s32.totalorder %s151, 7
        %s153 = scalar_select %p152, %s151, 7
        %s154 = smul.addr %s153, 8
        %s155 = scalar_lea.vmem %s0, %s154
        %p156 = pneg %p36
        %p157 = pneg %p33
        %s158 = smul.u32 4, %s15
        %p159 = scmp.lt.s32.totalorder %s158, 7
        %s160 = scalar_select %p159, %s158, 7
        %s161 = smul.addr %s160, 8
        %s162 = scalar_lea.vmem %s1, %s161
        %p163 = pneg %p62
        %p164 = pneg %p59
        %p165 = pneg %p83
        %p166 = pneg %p80
        %p167 = pneg %p104
        %p168 = pneg %p101
        %s169 = smul.u32 4, %s15
        %p170 = scmp.lt.s32.totalorder %s169, 7
        %s171 = scalar_select %p170, %s169, 7
        %s172 = smul.addr %s171, 8
        %s173 = scalar_lea.vmem %s0, %s172
        %s174 = smul.u32 4, %s15
        %s175 = smul.u32 4, %s15
        %p176 = scmp.lt.s32.totalorder %s175, 7
        %s177 = scalar_select %p176, %s175, 7
        %s178 = smul.addr %s177, 8
        %s179 = scalar_lea.vmem %s1, %s178
        %s180 = smul.u32 4, %s15
        %p181 = scmp.eq.s32.totalorder %s15, 0
        // Predicated region
        $region33: #{tpu_custom_call.1} parent=31 // pred_check
          %p182 = pneg %p181
        $region34: #{tpu_custom_call.1} parent=31 // pred_check_branch
          %184 = sbr.rel (%p182) target = $region36
        $region35: #{tpu_custom_call.1} parent=31 // pred_region
          %v185 = vld [vmem:[%s2] sm:$0xff]
          %v186 = vld [vmem:[%s2 + $0x8] sm:$0xff]
          %v187 = vld [vmem:[%s2 + $0x10] sm:$0xff]
          %v188 = vld [vmem:[%s2 + $0x18] sm:$0xff]
          %v189 = vld [vmem:[%s2 + $0x20] sm:$0xff]
          %v190 = vld [vmem:[%s2 + $0x28] sm:$0xff]
          %v191 = vld [vmem:[%s2 + $0x30] sm:$0xff]
          %v192 = vld [vmem:[%s2 + $0x38] sm:$0xff]
          %v193 = vmul.f32 %v185, %v185
          %v194 = vmul.f32 %v186, %v186
          %v195 = vmul.f32 %v187, %v187
          %v196 = vmul.f32 %v188, %v188
          %v197 = vmul.f32 %v189, %v189
          %v198 = vmul.f32 %v190, %v190
          %v199 = vmul.f32 %v191, %v191
          %v200 = vmul.f32 %v192, %v192
          %vm201 = vcmask 261120
          %v202 = vsel %vm201, %v193, 0.0
          %203 = vadd.xlane.f32.xlu0 %v202
          %v204 = vpop.xlane.xlu0 %203
          %v205 = vsel %vm201, %v194, 0.0
          %206 = vadd.xlane.f32.xlu0 %v205
          %v207 = vpop.xlane.xlu0 %206
          %v208 = vsel %vm201, %v195, 0.0
          %209 = vadd.xlane.f32.xlu0 %v208
          %v210 = vpop.xlane.xlu0 %209
          %v211 = vsel %vm201, %v196, 0.0
          %212 = vadd.xlane.f32.xlu0 %v211
          %v213 = vpop.xlane.xlu0 %212
          %v214 = vsel %vm201, %v197, 0.0
          %215 = vadd.xlane.f32.xlu0 %v214
          %v216 = vpop.xlane.xlu0 %215
          %v217 = vsel %vm201, %v198, 0.0
          %218 = vadd.xlane.f32.xlu0 %v217
          %v219 = vpop.xlane.xlu0 %218
          %v220 = vsel %vm201, %v199, 0.0
          %221 = vadd.xlane.f32.xlu0 %v220
          %v222 = vpop.xlane.xlu0 %221
          %v223 = vsel %vm201, %v200, 0.0
          %224 = vadd.xlane.f32.xlu0 %v223
          %v225 = vpop.xlane.xlu0 %224
          %v226 = vadd.f32 %v204, 1e-12
          %v227 = vadd.f32 %v207, 1e-12
          %v228 = vadd.f32 %v210, 1e-12
          %v229 = vadd.f32 %v213, 1e-12
          %v230 = vadd.f32 %v216, 1e-12
          %v231 = vadd.f32 %v219, 1e-12
          %v232 = vadd.f32 %v222, 1e-12
          %v233 = vadd.f32 %v225, 1e-12
          %v234 = vrsqrt.pop %v226
          %v235 = vmul.f32 %v226, %v234
          %vm236 = vcmp.eq.f32.partialorder %v226, inf
          %v237 = vsel %vm236, %v226, %v235
          %vm238 = vcmp.eq.f32.partialorder %v226, 0.0
          %v239 = vand.u32 %v226, 2147483648
          %v240 = vsel %vm238, %v239, %v237
          %v241 = vrsqrt.pop %v227
          %v242 = vmul.f32 %v227, %v241
          %vm243 = vcmp.eq.f32.partialorder %v227, inf
          %v244 = vsel %vm243, %v227, %v242
          %vm245 = vcmp.eq.f32.partialorder %v227, 0.0
          %v246 = vand.u32 %v227, 2147483648
          %v247 = vsel %vm245, %v246, %v244
          %v248 = vrsqrt.pop %v228
          %v249 = vmul.f32 %v228, %v248
          %vm250 = vcmp.eq.f32.partialorder %v228, inf
          %v251 = vsel %vm250, %v228, %v249
          %vm252 = vcmp.eq.f32.partialorder %v228, 0.0
          %v253 = vand.u32 %v228, 2147483648
          %v254 = vsel %vm252, %v253, %v251
          %v255 = vrsqrt.pop %v229
          %v256 = vmul.f32 %v229, %v255
          %vm257 = vcmp.eq.f32.partialorder %v229, inf
          %v258 = vsel %vm257, %v229, %v256
          %vm259 = vcmp.eq.f32.partialorder %v229, 0.0
          %v260 = vand.u32 %v229, 2147483648
          %v261 = vsel %vm259, %v260, %v258
          %v262 = vrsqrt.pop %v230
          %v263 = vmul.f32 %v230, %v262
          %vm264 = vcmp.eq.f32.partialorder %v230, inf
          %v265 = vsel %vm264, %v230, %v263
          %vm266 = vcmp.eq.f32.partialorder %v230, 0.0
          %v267 = vand.u32 %v230, 2147483648
          %v268 = vsel %vm266, %v267, %v265
          %v269 = vrsqrt.pop %v231
          %v270 = vmul.f32 %v231, %v269
          %vm271 = vcmp.eq.f32.partialorder %v231, inf
          %v272 = vsel %vm271, %v231, %v270
          %vm273 = vcmp.eq.f32.partialorder %v231, 0.0
          %v274 = vand.u32 %v231, 2147483648
          %v275 = vsel %vm273, %v274, %v272
          %v276 = vrsqrt.pop %v232
          %v277 = vmul.f32 %v232, %v276
          %vm278 = vcmp.eq.f32.partialorder %v232, inf
          %v279 = vsel %vm278, %v232, %v277
          %vm280 = vcmp.eq.f32.partialorder %v232, 0.0
          %v281 = vand.u32 %v232, 2147483648
          %v282 = vsel %vm280, %v281, %v279
          %v283 = vrsqrt.pop %v233
          %v284 = vmul.f32 %v233, %v283
          %vm285 = vcmp.eq.f32.partialorder %v233, inf
          %v286 = vsel %vm285, %v233, %v284
          %vm287 = vcmp.eq.f32.partialorder %v233, 0.0
          %v288 = vand.u32 %v233, 2147483648
          %v289 = vsel %vm287, %v288, %v286
          %v290 = vrcp.pop %v240
          %v291 = vmul.f32 %v185, %v290
          %v292 = vrcp.pop %v247
          %v293 = vmul.f32 %v186, %v292
          %v294 = vrcp.pop %v254
          %v295 = vmul.f32 %v187, %v294
          %v296 = vrcp.pop %v261
          %v297 = vmul.f32 %v188, %v296
          %v298 = vrcp.pop %v268
          %v299 = vmul.f32 %v189, %v298
          %v300 = vrcp.pop %v275
          %v301 = vmul.f32 %v190, %v300
          %v302 = vrcp.pop %v282
          %v303 = vmul.f32 %v191, %v302
          %v304 = vrcp.pop %v289
          %v305 = vmul.f32 %v192, %v304
          %306 = vst.msk [vmem:[#allocation2] sm:$0xff] %vm201, %v291
          %307 = vst.msk [vmem:[#allocation2 + $0x8] sm:$0xff] %vm201, %v293
          %308 = vst.msk [vmem:[#allocation2 + $0x10] sm:$0xff] %vm201, %v295
          %309 = vst.msk [vmem:[#allocation2 + $0x18] sm:$0xff] %vm201, %v297
          %310 = vst.msk [vmem:[#allocation2 + $0x20] sm:$0xff] %vm201, %v299
          %311 = vst.msk [vmem:[#allocation2 + $0x28] sm:$0xff] %vm201, %v301
          %312 = vst.msk [vmem:[#allocation2 + $0x30] sm:$0xff] %vm201, %v303
          %313 = vst.msk [vmem:[#allocation2 + $0x38] sm:$0xff] %vm201, %v305
          %vm314 = vcmask 7168
          %315 = vst.msk [vmem:[#allocation3] sm:$0xff] %vm314, 0.0
          %316 = vst.msk [vmem:[#allocation3 + $0x8] sm:$0xff] %vm314, 0.0
          %317 = vst.msk [vmem:[#allocation3 + $0x10] sm:$0xff] %vm314, 0.0
          %318 = vst.msk [vmem:[#allocation3 + $0x18] sm:$0xff] %vm314, 0.0
          %319 = vst.msk [vmem:[#allocation4] sm:$0xff] %vm314, 0.0
          %320 = vst.msk [vmem:[#allocation4 + $0x8] sm:$0xff] %vm314, 0.0
          %321 = vst.msk [vmem:[#allocation4 + $0x10] sm:$0xff] %vm314, 0.0
          %322 = vst.msk [vmem:[#allocation4 + $0x18] sm:$0xff] %vm314, 0.0
        $region36: #{tpu_custom_call.1} parent=31 // pred_fallthru
          _
        %v323 = vld [vmem:[%s173] sm:$0xff]
        %v324 = vld [vmem:[%s173 + $0x8] sm:$0xff]
        %v325 = vld [vmem:[%s173 + $0x10] sm:$0xff]
        %v326 = vld [vmem:[%s173 + $0x18] sm:$0xff]
        %v327 = vld [vmem:[%s179] sm:$0xff]
        %v328 = vld [vmem:[%s179 + $0x8] sm:$0xff]
        %v329 = vld [vmem:[%s179 + $0x10] sm:$0xff]
        %v330 = vld [vmem:[%s179 + $0x18] sm:$0xff]
        %v331 = vmul.f32 %v323, %v323
        %v332 = vmul.f32 %v324, %v324
        %v333 = vmul.f32 %v325, %v325
        %v334 = vmul.f32 %v326, %v326
        %vm335 = vcmask 261120
        %v336 = vsel %vm335, %v331, 0.0
        %337 = vadd.xlane.f32.xlu0 %v336
        %v338 = vpop.xlane.xlu0 %337
        %v339 = vsel %vm335, %v332, 0.0
        %340 = vadd.xlane.f32.xlu0 %v339
        %v341 = vpop.xlane.xlu0 %340
        %v342 = vsel %vm335, %v333, 0.0
        %343 = vadd.xlane.f32.xlu0 %v342
        %v344 = vpop.xlane.xlu0 %343
        %v345 = vsel %vm335, %v334, 0.0
        %346 = vadd.xlane.f32.xlu0 %v345
        %v347 = vpop.xlane.xlu0 %346
        %v348 = vadd.f32 %v338, 1e-12
        %v349 = vadd.f32 %v341, 1e-12
        %v350 = vadd.f32 %v344, 1e-12
        %v351 = vadd.f32 %v347, 1e-12
        %v352 = vrsqrt.pop %v348
        %v353 = vmul.f32 %v348, %v352
        %vm354 = vcmp.eq.f32.partialorder %v348, inf
        %v355 = vsel %vm354, %v348, %v353
        %vm356 = vcmp.eq.f32.partialorder %v348, 0.0
        %v357 = vand.u32 %v348, 2147483648
        %v358 = vsel %vm356, %v357, %v355
        %v359 = vrsqrt.pop %v349
        %v360 = vmul.f32 %v349, %v359
        %vm361 = vcmp.eq.f32.partialorder %v349, inf
        %v362 = vsel %vm361, %v349, %v360
        %vm363 = vcmp.eq.f32.partialorder %v349, 0.0
        %v364 = vand.u32 %v349, 2147483648
        %v365 = vsel %vm363, %v364, %v362
        %v366 = vrsqrt.pop %v350
        %v367 = vmul.f32 %v350, %v366
        %vm368 = vcmp.eq.f32.partialorder %v350, inf
        %v369 = vsel %vm368, %v350, %v367
        %vm370 = vcmp.eq.f32.partialorder %v350, 0.0
        %v371 = vand.u32 %v350, 2147483648
        %v372 = vsel %vm370, %v371, %v369
        %v373 = vrsqrt.pop %v351
        %v374 = vmul.f32 %v351, %v373
        %vm375 = vcmp.eq.f32.partialorder %v351, inf
        %v376 = vsel %vm375, %v351, %v374
        %vm377 = vcmp.eq.f32.partialorder %v351, 0.0
        %v378 = vand.u32 %v351, 2147483648
        %v379 = vsel %vm377, %v378, %v376
        %v380 = vrcp.pop %v358
        %v381 = vmul.f32 %v323, %v380
        %v382 = vrcp.pop %v365
        %v383 = vmul.f32 %v324, %v382
        %v384 = vrcp.pop %v372
        %v385 = vmul.f32 %v325, %v384
        %v386 = vrcp.pop %v379
        %v387 = vmul.f32 %v326, %v386
        %v388 = vmul.f32 %v327, %v327
        %v389 = vmul.f32 %v328, %v328
        %v390 = vmul.f32 %v329, %v329
        %v391 = vmul.f32 %v330, %v330
        %v392 = vsel %vm335, %v388, 0.0
        %393 = vadd.xlane.f32.xlu0 %v392
        %v394 = vpop.xlane.xlu0 %393
        %v395 = vsel %vm335, %v389, 0.0
        %396 = vadd.xlane.f32.xlu0 %v395
        %v397 = vpop.xlane.xlu0 %396
        %v398 = vsel %vm335, %v390, 0.0
        %399 = vadd.xlane.f32.xlu0 %v398
        %v400 = vpop.xlane.xlu0 %399
        %v401 = vsel %vm335, %v391, 0.0
        %402 = vadd.xlane.f32.xlu0 %v401
        %v403 = vpop.xlane.xlu0 %402
        %v404 = vadd.f32 %v394, 1e-12
        %v405 = vadd.f32 %v397, 1e-12
        %v406 = vadd.f32 %v400, 1e-12
        %v407 = vadd.f32 %v403, 1e-12
        %v408 = vrsqrt.pop %v404
        %v409 = vmul.f32 %v404, %v408
        %vm410 = vcmp.eq.f32.partialorder %v404, inf
        %v411 = vsel %vm410, %v404, %v409
        %vm412 = vcmp.eq.f32.partialorder %v404, 0.0
        %v413 = vand.u32 %v404, 2147483648
        %v414 = vsel %vm412, %v413, %v411
        %v415 = vrsqrt.pop %v405
        %v416 = vmul.f32 %v405, %v415
        %vm417 = vcmp.eq.f32.partialorder %v405, inf
        %v418 = vsel %vm417, %v405, %v416
        %vm419 = vcmp.eq.f32.partialorder %v405, 0.0
        %v420 = vand.u32 %v405, 2147483648
        %v421 = vsel %vm419, %v420, %v418
        %v422 = vrsqrt.pop %v406
        %v423 = vmul.f32 %v406, %v422
        %vm424 = vcmp.eq.f32.partialorder %v406, inf
        %v425 = vsel %vm424, %v406, %v423
        %vm426 = vcmp.eq.f32.partialorder %v406, 0.0
        %v427 = vand.u32 %v406, 2147483648
        %v428 = vsel %vm426, %v427, %v425
        %v429 = vrsqrt.pop %v407
        %v430 = vmul.f32 %v407, %v429
        %vm431 = vcmp.eq.f32.partialorder %v407, inf
        %v432 = vsel %vm431, %v407, %v430
        %vm433 = vcmp.eq.f32.partialorder %v407, 0.0
        %v434 = vand.u32 %v407, 2147483648
        %v435 = vsel %vm433, %v434, %v432
        %v436 = vrcp.pop %v414
        %v437 = vmul.f32 %v327, %v436
        %v438 = vrcp.pop %v421
        %v439 = vmul.f32 %v328, %v438
        %v440 = vrcp.pop %v428
        %v441 = vmul.f32 %v329, %v440
        %v442 = vrcp.pop %v435
        %v443 = vmul.f32 %v330, %v442
        %v444 = vld [vmem:[#allocation2] sm:$0xff]
        %v445 = vld [vmem:[#allocation2 + $0x8] sm:$0xff]
        %v446 = vld [vmem:[#allocation2 + $0x10] sm:$0xff]
        %v447 = vld [vmem:[#allocation2 + $0x18] sm:$0xff]
        %v448 = vld [vmem:[#allocation2 + $0x20] sm:$0xff]
        %v449 = vld [vmem:[#allocation2 + $0x28] sm:$0xff]
        %v450 = vld [vmem:[#allocation2 + $0x30] sm:$0xff]
        %v451 = vld [vmem:[#allocation2 + $0x38] sm:$0xff]
        %v453 = vsel %vm335, %v381, 0
        %v456 = vsel %vm335, %v383, 0
        %v459 = vsel %vm335, %v385, 0
        %v462 = vsel %vm335, %v387, 0
        %v465 = vsel %vm335, %v444, 0
        %v468 = vsel %vm335, %v445, 0
        %v471 = vsel %vm335, %v446, 0
        %v474 = vsel %vm335, %v447, 0
        %v477 = vsel %vm335, %v448, 0
        %v480 = vsel %vm335, %v449, 0
        %v483 = vsel %vm335, %v450, 0
        %v486 = vsel %vm335, %v451, 0
        %488 = vmatprep.subr.mxu0 0.0
        %489 = vmatpush1.xpose.msra.mxu0 0.0
        %490 = vmatprep.subr.mxu0 0.0
        %491 = vmatpush1.xpose.msra.mxu0 0.0
        %492 = vmatprep.subr.mxu0 0.0
        %493 = vmatpush1.xpose.msra.mxu0 0.0
        %494 = vmatprep.subr.mxu0 0.0
        %495 = vmatpush1.xpose.msra.mxu0 0.0
        %496 = vmatprep.subr.mxu0 0.0
        %497 = vmatpush1.xpose.msra.mxu0 0.0
        %498 = vmatprep.subr.mxu0 0.0
        %499 = vmatpush1.xpose.msra.mxu0 0.0
        %500 = vmatprep.subr.mxu0 0.0
        %501 = vmatpush1.xpose.msra.mxu0 0.0
        %502 = vmatprep.subr.mxu0 0.0
        %503 = vmatpush1.xpose.msra.mxu0 0.0
        %504 = vmatprep.subr.mxu0 0.0
        %505 = vmatpush1.xpose.msra.mxu0 %v486
        %506 = vmatprep.subr.mxu0 0.0
        %507 = vmatpush1.xpose.msra.mxu0 %v483
        %508 = vmatprep.subr.mxu0 0.0
        %509 = vmatpush1.xpose.msra.mxu0 %v480
        %510 = vmatprep.subr.mxu0 0.0
        %511 = vmatpush1.xpose.msra.mxu0 %v477
        %512 = vmatprep.subr.mxu0 0.0
        %513 = vmatpush1.xpose.msra.mxu0 %v474
        %514 = vmatprep.subr.mxu0 0.0
        %515 = vmatpush1.xpose.msra.mxu0 %v471
        %516 = vmatprep.subr.mxu0 0.0
        %517 = vmatpush1.xpose.msra.mxu0 %v468
        %518 = vmatprep.subr.mxu0 0.0
        %519 = vmatpush1.xpose.msra.mxu0 %v465
        %520 = vmatprep.subr.mxu0 0.0
        %521 = vmatpush2.xpose.msra.mxu0 0.0
        %522 = vmatprep.subr.mxu0 0.0
        %523 = vmatpush2.xpose.msra.mxu0 0.0
        %524 = vmatprep.subr.mxu0 0.0
        %525 = vmatpush2.xpose.msra.mxu0 0.0
        %526 = vmatprep.subr.mxu0 0.0
        %527 = vmatpush2.xpose.msra.mxu0 0.0
        %528 = vmatprep.subr.mxu0 0.0
        %529 = vmatpush2.xpose.msra.mxu0 0.0
        %530 = vmatprep.subr.mxu0 0.0
        %531 = vmatpush2.xpose.msra.mxu0 0.0
        %532 = vmatprep.subr.mxu0 0.0
        %533 = vmatpush2.xpose.msra.mxu0 0.0
        %534 = vmatprep.subr.mxu0 0.0
        %535 = vmatpush2.xpose.msra.mxu0 0.0
        %536 = vmatprep.subr.mxu0 0.0
        %537 = vmatpush2.xpose.msra.mxu0 0.0
        %538 = vmatprep.subr.mxu0 0.0
        %539 = vmatpush2.xpose.msra.mxu0 0.0
        %540 = vmatprep.subr.mxu0 0.0
        %541 = vmatpush2.xpose.msra.mxu0 0.0
        %542 = vmatprep.subr.mxu0 0.0
        %543 = vmatpush2.xpose.msra.mxu0 0.0
        %544 = vmatprep.subr.mxu0 0.0
        %545 = vmatpush2.xpose.msra.mxu0 0.0
        %546 = vmatprep.subr.mxu0 0.0
        %547 = vmatpush2.xpose.msra.mxu0 0.0
        %548 = vmatprep.subr.mxu0 0.0
        %549 = vmatpush2.xpose.msra.mxu0 0.0
        %550 = vmatprep.subr.mxu0 0.0
        %551 = vmatpush2.xpose.msra.mxu0 0.0
        %552 = vmatprep.mubr.f32.mxu0 0.0
        %553 = vmatmul.mubr.f32.gmra.mxu0 %v453
        %v554 = vpop.f32.mrf.mxu0
        %v555 = vadd.f32 0.0, %v554
        %v556 = vpop.f32.mrf.mxu0
        %557 = vmatprep.mubr.f32.mxu0 0.0
        %558 = vmatmul.mubr.f32.gmra.mxu0 %v456
        %v559 = vpop.f32.mrf.mxu0
        %v560 = vadd.f32 0.0, %v559
        %v561 = vpop.f32.mrf.mxu0
        %562 = vmatprep.mubr.f32.mxu0 0.0
        %563 = vmatmul.mubr.f32.gmra.mxu0 %v459
        %v564 = vpop.f32.mrf.mxu0
        %v565 = vadd.f32 0.0, %v564
        %v566 = vpop.f32.mrf.mxu0
        %567 = vmatprep.mubr.f32.mxu0 0.0
        %568 = vmatmul.mubr.f32.gmra.mxu0 %v462
        %v569 = vpop.f32.mrf.mxu0
        %v570 = vadd.f32 0.0, %v569
        %v571 = vpop.f32.mrf.mxu0
        %572 = vdwg.mxu0
        %v574 = vsel %vm335, %v437, 0
        %v577 = vsel %vm335, %v439, 0
        %v580 = vsel %vm335, %v441, 0
        %v583 = vsel %vm335, %v443, 0
        %585 = vmatprep.subr.mxu0 0.0
        %586 = vmatpush1.xpose.msra.mxu0 0.0
        %587 = vmatprep.subr.mxu0 0.0
        %588 = vmatpush1.xpose.msra.mxu0 0.0
        %589 = vmatprep.subr.mxu0 0.0
        %590 = vmatpush1.xpose.msra.mxu0 0.0
        %591 = vmatprep.subr.mxu0 0.0
        %592 = vmatpush1.xpose.msra.mxu0 0.0
        %593 = vmatprep.subr.mxu0 0.0
        %594 = vmatpush1.xpose.msra.mxu0 0.0
        %595 = vmatprep.subr.mxu0 0.0
        %596 = vmatpush1.xpose.msra.mxu0 0.0
        %597 = vmatprep.subr.mxu0 0.0
        %598 = vmatpush1.xpose.msra.mxu0 0.0
        %599 = vmatprep.subr.mxu0 0.0
        %600 = vmatpush1.xpose.msra.mxu0 0.0
        %601 = vmatprep.subr.mxu0 0.0
        %602 = vmatpush1.xpose.msra.mxu0 %v486
        %603 = vmatprep.subr.mxu0 0.0
        %604 = vmatpush1.xpose.msra.mxu0 %v483
        %605 = vmatprep.subr.mxu0 0.0
        %606 = vmatpush1.xpose.msra.mxu0 %v480
        %607 = vmatprep.subr.mxu0 0.0
        %608 = vmatpush1.xpose.msra.mxu0 %v477
        %609 = vmatprep.subr.mxu0 0.0
        %610 = vmatpush1.xpose.msra.mxu0 %v474
        %611 = vmatprep.subr.mxu0 0.0
        %612 = vmatpush1.xpose.msra.mxu0 %v471
        %613 = vmatprep.subr.mxu0 0.0
        %614 = vmatpush1.xpose.msra.mxu0 %v468
        %615 = vmatprep.subr.mxu0 0.0
        %616 = vmatpush1.xpose.msra.mxu0 %v465
        %617 = vmatprep.subr.mxu0 0.0
        %618 = vmatpush2.xpose.msra.mxu0 0.0
        %619 = vmatprep.subr.mxu0 0.0
        %620 = vmatpush2.xpose.msra.mxu0 0.0
        %621 = vmatprep.subr.mxu0 0.0
        %622 = vmatpush2.xpose.msra.mxu0 0.0
        %623 = vmatprep.subr.mxu0 0.0
        %624 = vmatpush2.xpose.msra.mxu0 0.0
        %625 = vmatprep.subr.mxu0 0.0
        %626 = vmatpush2.xpose.msra.mxu0 0.0
        %627 = vmatprep.subr.mxu0 0.0
        %628 = vmatpush2.xpose.msra.mxu0 0.0
        %629 = vmatprep.subr.mxu0 0.0
        %630 = vmatpush2.xpose.msra.mxu0 0.0
        %631 = vmatprep.subr.mxu0 0.0
        %632 = vmatpush2.xpose.msra.mxu0 0.0
        %633 = vmatprep.subr.mxu0 0.0
        %634 = vmatpush2.xpose.msra.mxu0 0.0
        %635 = vmatprep.subr.mxu0 0.0
        %636 = vmatpush2.xpose.msra.mxu0 0.0
        %637 = vmatprep.subr.mxu0 0.0
        %638 = vmatpush2.xpose.msra.mxu0 0.0
        %639 = vmatprep.subr.mxu0 0.0
        %640 = vmatpush2.xpose.msra.mxu0 0.0
        %641 = vmatprep.subr.mxu0 0.0
        %642 = vmatpush2.xpose.msra.mxu0 0.0
        %643 = vmatprep.subr.mxu0 0.0
        %644 = vmatpush2.xpose.msra.mxu0 0.0
        %645 = vmatprep.subr.mxu0 0.0
        %646 = vmatpush2.xpose.msra.mxu0 0.0
        %647 = vmatprep.subr.mxu0 0.0
        %648 = vmatpush2.xpose.msra.mxu0 0.0
        %649 = vmatprep.mubr.f32.mxu0 0.0
        %650 = vmatmul.mubr.f32.gmra.mxu0 %v574
        %v651 = vpop.f32.mrf.mxu0
        %v652 = vadd.f32 0.0, %v651
        %v653 = vpop.f32.mrf.mxu0
        %654 = vmatprep.mubr.f32.mxu0 0.0
        %655 = vmatmul.mubr.f32.gmra.mxu0 %v577
        %v656 = vpop.f32.mrf.mxu0
        %v657 = vadd.f32 0.0, %v656
        %v658 = vpop.f32.mrf.mxu0
        %659 = vmatprep.mubr.f32.mxu0 0.0
        %660 = vmatmul.mubr.f32.gmra.mxu0 %v580
        %v661 = vpop.f32.mrf.mxu0
        %v662 = vadd.f32 0.0, %v661
        %v663 = vpop.f32.mrf.mxu0
        %664 = vmatprep.mubr.f32.mxu0 0.0
        %665 = vmatmul.mubr.f32.gmra.mxu0 %v583
        %v666 = vpop.f32.mrf.mxu0
        %v667 = vadd.f32 0.0, %v666
        %v668 = vpop.f32.mrf.mxu0
        %669 = vdwg.mxu0
        %v670 = vmul.f32 %v555, 2.0
        %v671 = vmul.f32 %v560, 2.0
        %v672 = vmul.f32 %v565, 2.0
        %v673 = vmul.f32 %v570, 2.0
        %v674 = vsub.f32 2.0, %v670
        %v675 = vsub.f32 2.0, %v671
        %v676 = vsub.f32 2.0, %v672
        %v677 = vsub.f32 2.0, %v673
        %v678 = vmax.f32 %v674, 0.0
        %v679 = vmax.f32 %v675, 0.0
        %v680 = vmax.f32 %v676, 0.0
        %v681 = vmax.f32 %v677, 0.0
        %v682 = vmul.f32 %v652, 2.0
        %v683 = vmul.f32 %v657, 2.0
        %v684 = vmul.f32 %v662, 2.0
        %v685 = vmul.f32 %v667, 2.0
        %v686 = vsub.f32 2.0, %v682
        %v687 = vsub.f32 2.0, %v683
        %v688 = vsub.f32 2.0, %v684
        %v689 = vsub.f32 2.0, %v685
        %v690 = vmax.f32 %v686, 0.0
        %v691 = vmax.f32 %v687, 0.0
        %v692 = vmax.f32 %v688, 0.0
        %v693 = vmax.f32 %v689, 0.0
        %v694 = vlaneseq
        %v695 = vand.u32 %v694, 127
        %v696 = vlaneseq
        %v697 = vshrl.u32 %v696, 7
        %v698 = vadd.s32 %v697, 8
        %v699 = vadd.s32 %v697, 16
        %v700 = vadd.s32 %v697, 24
        %s701 = smul.u32 %s15, 32
        %v702 = vstv %s701
        %v703 = vadd.s32 %v697, %v702
        %v704 = vadd.s32 %v698, %v702
        %v705 = vadd.s32 %v699, %v702
        %v706 = vadd.s32 %v700, %v702
        %vm707 = vcmp.eq.s32.totalorder %v695, %v703
        %vm708 = vcmp.eq.s32.totalorder %v695, %v704
        %vm709 = vcmp.eq.s32.totalorder %v695, %v705
        %vm710 = vcmp.eq.s32.totalorder %v695, %v706
        %v711 = vsel %vm707, inf, %v678
        %v712 = vsel %vm708, inf, %v679
        %v713 = vsel %vm709, inf, %v680
        %v714 = vsel %vm710, inf, %v681
        loop: start=0, step=1, limit=16
        $region37: #{tpu_custom_call.1} parent=31 // loop_pre_header
          _
        $region38: #{tpu_custom_call.1} parent=31 // loop_header
          %s716 = sphi 0, %s720
          %p717 = scmp.ge.s32.totalorder %s716, 16
          %v721 = vphi %v711, %v818
          %v722 = vphi %v712, %v819
          %v723 = vphi %v713, %v820
          %v724 = vphi %v714, %v821
          %v725 = vphi 0.0, %v930
          %v726 = vphi 0.0, %v931
          %v727 = vphi 0.0, %v932
          %v728 = vphi 0.0, %v933
          %v729 = vphi 0.0, %v938
          %v730 = vphi 0.0, %v939
          %v731 = vphi 0.0, %v940
          %v732 = vphi 0.0, %v941
        $region39: #{tpu_custom_call.1} parent=31 // loop_header_branch
          %719 = sbr.rel (%p717) target = $region43
        $region40: #{tpu_custom_call.1} parent=31 // loop_body
          %vm733 = vcmask 523264
          %v734 = vsel %vm733, %v721, inf
          %735 = vmin.xlane.f32.xlu0 %v734
          %v736 = vpop.xlane.xlu0 %735
          %v737 = vsel %vm733, %v722, inf
          %738 = vmin.xlane.f32.xlu0 %v737
          %v739 = vpop.xlane.xlu0 %738
          %v740 = vsel %vm733, %v723, inf
          %741 = vmin.xlane.f32.xlu0 %v740
          %v742 = vpop.xlane.xlu0 %741
          %v743 = vsel %vm733, %v724, inf
          %744 = vmin.xlane.f32.xlu0 %v743
          %v745 = vpop.xlane.xlu0 %744
          %vm746 = vcmp.le.f32.partialorder %v721, %v736
          %vm747 = vcmp.le.f32.partialorder %v722, %v739
          %vm748 = vcmp.le.f32.partialorder %v723, %v742
          %vm749 = vcmp.le.f32.partialorder %v724, %v745
          %v750 = vsel %vm746, %v695, 64
          %v751 = vsel %vm747, %v695, 64
          %v752 = vsel %vm748, %v695, 64
          %v753 = vsel %vm749, %v695, 64
          %v754 = vsel %vm733, %v750, 2147483647
          %v755 = vand.u32 %v754, 65535
          %v756 = vshra.s32 %v754, 16
          %v757 = vcvt.s32.f32 %v755
          %v758 = vcvt.s32.f32 %v756
          %759 = vmin.xlane.f32.xlu0 %v758
          %v760 = vpop.xlane.xlu0 %759
          %vm761 = vcmp.eq.f32.partialorder %v758, %v760
          %v762 = vsel %vm761, %v757, inf
          %763 = vmin.xlane.f32.xlu0 %v762
          %v764 = vpop.xlane.xlu0 %763
          %v765 = vcvt.f32.s32 %v764
          %v766 = vcvt.f32.s32 %v760
          %v767 = vshll.u32 %v766, 16
          %v768 = vadd.s32 %v767, %v765
          %v769 = vsel %vm733, %v751, 2147483647
          %v770 = vand.u32 %v769, 65535
          %v771 = vshra.s32 %v769, 16
          %v772 = vcvt.s32.f32 %v770
          %v773 = vcvt.s32.f32 %v771
          %774 = vmin.xlane.f32.xlu0 %v773
          %v775 = vpop.xlane.xlu0 %774
          %vm776 = vcmp.eq.f32.partialorder %v773, %v775
          %v777 = vsel %vm776, %v772, inf
          %778 = vmin.xlane.f32.xlu0 %v777
          %v779 = vpop.xlane.xlu0 %778
          %v780 = vcvt.f32.s32 %v779
          %v781 = vcvt.f32.s32 %v775
          %v782 = vshll.u32 %v781, 16
          %v783 = vadd.s32 %v782, %v780
          %v784 = vsel %vm733, %v752, 2147483647
          %v785 = vand.u32 %v784, 65535
          %v786 = vshra.s32 %v784, 16
          %v787 = vcvt.s32.f32 %v785
          %v788 = vcvt.s32.f32 %v786
          %789 = vmin.xlane.f32.xlu0 %v788
          %v790 = vpop.xlane.xlu0 %789
          %vm791 = vcmp.eq.f32.partialorder %v788, %v790
          %v792 = vsel %vm791, %v787, inf
          %793 = vmin.xlane.f32.xlu0 %v792
          %v794 = vpop.xlane.xlu0 %793
          %v795 = vcvt.f32.s32 %v794
          %v796 = vcvt.f32.s32 %v790
          %v797 = vshll.u32 %v796, 16
          %v798 = vadd.s32 %v797, %v795
          %v799 = vsel %vm733, %v753, 2147483647
          %v800 = vand.u32 %v799, 65535
          %v801 = vshra.s32 %v799, 16
          %v802 = vcvt.s32.f32 %v800
          %v803 = vcvt.s32.f32 %v801
          %804 = vmin.xlane.f32.xlu0 %v803
          %v805 = vpop.xlane.xlu0 %804
          %vm806 = vcmp.eq.f32.partialorder %v803, %v805
          %v807 = vsel %vm806, %v802, inf
          %808 = vmin.xlane.f32.xlu0 %v807
          %v809 = vpop.xlane.xlu0 %808
          %v810 = vcvt.f32.s32 %v809
          %v811 = vcvt.f32.s32 %v805
          %v812 = vshll.u32 %v811, 16
          %v813 = vadd.s32 %v812, %v810
          %vm814 = vcmp.eq.s32.totalorder %v695, %v768
          %vm815 = vcmp.eq.s32.totalorder %v695, %v783
          %vm816 = vcmp.eq.s32.totalorder %v695, %v798
          %vm817 = vcmp.eq.s32.totalorder %v695, %v813
          %v818 = vsel %vm814, inf, %v721
          %v819 = vsel %vm815, inf, %v722
          %v820 = vsel %vm816, inf, %v723
          %v821 = vsel %vm817, inf, %v724
          %v822 = vadd.f32 %v736, 1e-12
          %v823 = vadd.f32 %v739, 1e-12
          %v824 = vadd.f32 %v742, 1e-12
          %v825 = vadd.f32 %v745, 1e-12
          %v826 = vrsqrt.pop %v822
          %v827 = vmul.f32 %v822, %v826
          %vm828 = vcmp.eq.f32.partialorder %v822, inf
          %v829 = vsel %vm828, %v822, %v827
          %vm830 = vcmp.eq.f32.partialorder %v822, 0.0
          %v831 = vand.u32 %v822, 2147483648
          %v832 = vsel %vm830, %v831, %v829
          %v833 = vrsqrt.pop %v823
          %v834 = vmul.f32 %v823, %v833
          %vm835 = vcmp.eq.f32.partialorder %v823, inf
          %v836 = vsel %vm835, %v823, %v834
          %vm837 = vcmp.eq.f32.partialorder %v823, 0.0
          %v838 = vand.u32 %v823, 2147483648
          %v839 = vsel %vm837, %v838, %v836
          %v840 = vrsqrt.pop %v824
          %v841 = vmul.f32 %v824, %v840
          %vm842 = vcmp.eq.f32.partialorder %v824, inf
          %v843 = vsel %vm842, %v824, %v841
          %vm844 = vcmp.eq.f32.partialorder %v824, 0.0
          %v845 = vand.u32 %v824, 2147483648
          %v846 = vsel %vm844, %v845, %v843
          %v847 = vrsqrt.pop %v825
          %v848 = vmul.f32 %v825, %v847
          %vm849 = vcmp.eq.f32.partialorder %v825, inf
          %v850 = vsel %vm849, %v825, %v848
          %vm851 = vcmp.eq.f32.partialorder %v825, 0.0
          %v852 = vand.u32 %v825, 2147483648
          %v853 = vsel %vm851, %v852, %v850
          %v854 = vmul.f32 %v832, 0.5
          %v855 = vmul.f32 %v839, 0.5
          %v856 = vmul.f32 %v846, 0.5
          %v857 = vmul.f32 %v853, 0.5
          %v858 = vsel %vm814, %v690, 0.0
          %v859 = vsel %vm815, %v691, 0.0
          %v860 = vsel %vm816, %v692, 0.0
          %v861 = vsel %vm817, %v693, 0.0
          %v862 = vsel %vm733, %v858, 0.0
          %863 = vadd.xlane.f32.xlu0 %v862
          %v864 = vpop.xlane.xlu0 %863
          %v865 = vsel %vm733, %v859, 0.0
          %866 = vadd.xlane.f32.xlu0 %v865
          %v867 = vpop.xlane.xlu0 %866
          %v868 = vsel %vm733, %v860, 0.0
          %869 = vadd.xlane.f32.xlu0 %v868
          %v870 = vpop.xlane.xlu0 %869
          %v871 = vsel %vm733, %v861, 0.0
          %872 = vadd.xlane.f32.xlu0 %v871
          %v873 = vpop.xlane.xlu0 %872
          %v874 = vadd.f32 %v864, 1e-12
          %v875 = vadd.f32 %v867, 1e-12
          %v876 = vadd.f32 %v870, 1e-12
          %v877 = vadd.f32 %v873, 1e-12
          %v878 = vrsqrt.pop %v874
          %v879 = vmul.f32 %v874, %v878
          %vm880 = vcmp.eq.f32.partialorder %v874, inf
          %v881 = vsel %vm880, %v874, %v879
          %vm882 = vcmp.eq.f32.partialorder %v874, 0.0
          %v883 = vand.u32 %v874, 2147483648
          %v884 = vsel %vm882, %v883, %v881
          %v885 = vrsqrt.pop %v875
          %v886 = vmul.f32 %v875, %v885
          %vm887 = vcmp.eq.f32.partialorder %v875, inf
          %v888 = vsel %vm887, %v875, %v886
          %vm889 = vcmp.eq.f32.partialorder %v875, 0.0
          %v890 = vand.u32 %v875, 2147483648
          %v891 = vsel %vm889, %v890, %v888
          %v892 = vrsqrt.pop %v876
          %v893 = vmul.f32 %v876, %v892
          %vm894 = vcmp.eq.f32.partialorder %v876, inf
          %v895 = vsel %vm894, %v876, %v893
          %vm896 = vcmp.eq.f32.partialorder %v876, 0.0
          %v897 = vand.u32 %v876, 2147483648
          %v898 = vsel %vm896, %v897, %v895
          %v899 = vrsqrt.pop %v877
          %v900 = vmul.f32 %v877, %v899
          %vm901 = vcmp.eq.f32.partialorder %v877, inf
          %v902 = vsel %vm901, %v877, %v900
          %vm903 = vcmp.eq.f32.partialorder %v877, 0.0
          %v904 = vand.u32 %v877, 2147483648
          %v905 = vsel %vm903, %v904, %v902
          %v906 = vmul.f32 %v884, 0.5
          %v907 = vmul.f32 %v891, 0.5
          %v908 = vmul.f32 %v898, 0.5
          %v909 = vmul.f32 %v905, 0.5
          %v910 = vsub.f32 %v854, %v906
          %v911 = vsub.f32 %v855, %v907
          %v912 = vsub.f32 %v856, %v908
          %v913 = vsub.f32 %v857, %v909
          %v914 = vmul.f32 %v910, %v910
          %v915 = vmul.f32 %v911, %v911
          %v916 = vmul.f32 %v912, %v912
          %v917 = vmul.f32 %v913, %v913
          %v918 = vsub.f32 %v914, 0.0025
          %v919 = vsub.f32 %v915, 0.0025
          %v920 = vsub.f32 %v916, 0.0025
          %v921 = vsub.f32 %v917, 0.0025
          %vm922 = vcmp.gt.f32.partialorder %v918, 0.0
          %vm923 = vcmp.gt.f32.partialorder %v919, 0.0
          %vm924 = vcmp.gt.f32.partialorder %v920, 0.0
          %vm925 = vcmp.gt.f32.partialorder %v921, 0.0
          %v926 = vsel %vm922, %v918, 0.0
          %v927 = vsel %vm923, %v919, 0.0
          %v928 = vsel %vm924, %v920, 0.0
          %v929 = vsel %vm925, %v921, 0.0
          %v930 = vadd.f32 %v725, %v926
          %v931 = vadd.f32 %v726, %v927
          %v932 = vadd.f32 %v727, %v928
          %v933 = vadd.f32 %v728, %v929
          %p934 = scmp.eq.s32.totalorder %s716, 0
          %s935 = scalar_select %p934, 1, 0
          %v936 = vstv %s935
          %vm937 = vcmp.eq.s32.totalorder %v936, 1
          %v938 = vsel %vm937, %v854, %v729
          %v939 = vsel %vm937, %v855, %v730
          %v940 = vsel %vm937, %v856, %v731
          %v941 = vsel %vm937, %v857, %v732
        $region41: #{tpu_custom_call.1} parent=31 // loop_footer
          %s720 = sadd.s32 1, %s716
        $region42: #{tpu_custom_call.1} parent=31 // loop_footer_branch
          %715 = sbr.rel target = $region38
        $region43: #{tpu_custom_call.1} parent=31 // loop_exit
          _
        %v942 = vsub.f32 %v381, %v437
        %v943 = vsub.f32 %v383, %v439
        %v944 = vsub.f32 %v385, %v441
        %v945 = vsub.f32 %v387, %v443
        %v946 = vmul.f32 %v942, %v942
        %v947 = vmul.f32 %v943, %v943
        %v948 = vmul.f32 %v944, %v944
        %v949 = vmul.f32 %v945, %v945
        %v950 = vsel %vm335, %v946, 0.0
        %951 = vadd.xlane.f32.xlu0 %v950
        %v952 = vpop.xlane.xlu0 %951
        %v953 = vsel %vm335, %v947, 0.0
        %954 = vadd.xlane.f32.xlu0 %v953
        %v955 = vpop.xlane.xlu0 %954
        %v956 = vsel %vm335, %v948, 0.0
        %957 = vadd.xlane.f32.xlu0 %v956
        %v958 = vpop.xlane.xlu0 %957
        %v959 = vsel %vm335, %v949, 0.0
        %960 = vadd.xlane.f32.xlu0 %v959
        %v961 = vpop.xlane.xlu0 %960
        %v962 = vadd.f32 %v952, 1e-12
        %v963 = vadd.f32 %v955, 1e-12
        %v964 = vadd.f32 %v958, 1e-12
        %v965 = vadd.f32 %v961, 1e-12
        %v966 = vrsqrt.pop %v962
        %v967 = vmul.f32 %v962, %v966
        %vm968 = vcmp.eq.f32.partialorder %v962, inf
        %v969 = vsel %vm968, %v962, %v967
        %vm970 = vcmp.eq.f32.partialorder %v962, 0.0
        %v971 = vand.u32 %v962, 2147483648
        %v972 = vsel %vm970, %v971, %v969
        %v973 = vrsqrt.pop %v963
        %v974 = vmul.f32 %v963, %v973
        %vm975 = vcmp.eq.f32.partialorder %v963, inf
        %v976 = vsel %vm975, %v963, %v974
        %vm977 = vcmp.eq.f32.partialorder %v963, 0.0
        %v978 = vand.u32 %v963, 2147483648
        %v979 = vsel %vm977, %v978, %v976
        %v980 = vrsqrt.pop %v964
        %v981 = vmul.f32 %v964, %v980
        %vm982 = vcmp.eq.f32.partialorder %v964, inf
        %v983 = vsel %vm982, %v964, %v981
        %vm984 = vcmp.eq.f32.partialorder %v964, 0.0
        %v985 = vand.u32 %v964, 2147483648
        %v986 = vsel %vm984, %v985, %v983
        %v987 = vrsqrt.pop %v965
        %v988 = vmul.f32 %v965, %v987
        %vm989 = vcmp.eq.f32.partialorder %v965, inf
        %v990 = vsel %vm989, %v965, %v988
        %vm991 = vcmp.eq.f32.partialorder %v965, 0.0
        %v992 = vand.u32 %v965, 2147483648
        %v993 = vsel %vm991, %v992, %v990
        %v994 = vmul.f32 %v972, 0.5
        %v995 = vmul.f32 %v979, 0.5
        %v996 = vmul.f32 %v986, 0.5
        %v997 = vmul.f32 %v993, 0.5
        %v998 = vadd.f32 %v994, 0.5
        %v999 = vadd.f32 %v995, 0.5
        %v1000 = vadd.f32 %v996, 0.5
        %v1001 = vadd.f32 %v997, 0.5
        %v1002 = vsub.f32 %v998, %v729
        %v1003 = vsub.f32 %v999, %v730
        %v1004 = vsub.f32 %v1000, %v731
        %v1005 = vsub.f32 %v1001, %v732
        %vm1006 = vcmp.gt.f32.partialorder %v1002, 0.0
        %vm1007 = vcmp.gt.f32.partialorder %v1003, 0.0
        %vm1008 = vcmp.gt.f32.partialorder %v1004, 0.0
        %vm1009 = vcmp.gt.f32.partialorder %v1005, 0.0
        %v1010 = vsel %vm1006, %v1002, 0.0
        %v1011 = vsel %vm1007, %v1003, 0.0
        %v1012 = vsel %vm1008, %v1004, 0.0
        %v1013 = vsel %vm1009, %v1005, 0.0
        %v1014 = vld [vmem:[#allocation3] sm:$0xff]
        %v1015 = vld [vmem:[#allocation3 + $0x8] sm:$0xff]
        %v1016 = vld [vmem:[#allocation3 + $0x10] sm:$0xff]
        %v1017 = vld [vmem:[#allocation3 + $0x18] sm:$0xff]
        %v1018 = vadd.f32 %v1014, %v725
        %v1019 = vadd.f32 %v1015, %v726
        %v1020 = vadd.f32 %v1016, %v727
        %v1021 = vadd.f32 %v1017, %v728
        %vm1022 = vcmask 7168
        %1023 = vst.msk [vmem:[#allocation3] sm:$0xff] %vm1022, %v1018
        %1024 = vst.msk [vmem:[#allocation3 + $0x8] sm:$0xff] %vm1022, %v1019
        %1025 = vst.msk [vmem:[#allocation3 + $0x10] sm:$0xff] %vm1022, %v1020
        %1026 = vst.msk [vmem:[#allocation3 + $0x18] sm:$0xff] %vm1022, %v1021
        %v1027 = vld [vmem:[#allocation4] sm:$0xff]
        %v1028 = vld [vmem:[#allocation4 + $0x8] sm:$0xff]
        %v1029 = vld [vmem:[#allocation4 + $0x10] sm:$0xff]
        %v1030 = vld [vmem:[#allocation4 + $0x18] sm:$0xff]
        %v1031 = vadd.f32 %v1027, %v1010
        %v1032 = vadd.f32 %v1028, %v1011
        %v1033 = vadd.f32 %v1029, %v1012
        %v1034 = vadd.f32 %v1030, %v1013
        %1035 = vst.msk [vmem:[#allocation4] sm:$0xff] %vm1022, %v1031
        %1036 = vst.msk [vmem:[#allocation4 + $0x8] sm:$0xff] %vm1022, %v1032
        %1037 = vst.msk [vmem:[#allocation4 + $0x10] sm:$0xff] %vm1022, %v1033
        %1038 = vst.msk [vmem:[#allocation4 + $0x18] sm:$0xff] %vm1022, %v1034
        %p1039 = scmp.eq.s32.totalorder %s15, 1
        // Predicated region
        $region44: #{tpu_custom_call.1} parent=31 // pred_check
          %p1040 = pneg %p1039
        $region45: #{tpu_custom_call.1} parent=31 // pred_check_branch
          %1042 = sbr.rel (%p1040) target = $region47
        $region46: #{tpu_custom_call.1} parent=31 // pred_region
          %v1043 = vld [vmem:[#allocation3] sm:$0xff]
          %v1044 = vld [vmem:[#allocation3 + $0x8] sm:$0xff]
          %v1045 = vld [vmem:[#allocation3 + $0x10] sm:$0xff]
          %v1046 = vld [vmem:[#allocation3 + $0x18] sm:$0xff]
          %v1047 = vsel %vm1022, %v1043, 0.0
          %v1048 = vsel %vm1022, %v1044, 0.0
          %v1049 = vadd.f32 %v1047, %v1048
          %v1050 = vsel %vm1022, %v1045, 0.0
          %v1051 = vadd.f32 %v1049, %v1050
          %v1052 = vsel %vm1022, %v1046, 0.0
          %v1053 = vadd.f32 %v1051, %v1052
          %1054 = vadd.xlane.f32.xlu0 %v1053
          %v1055 = vpop.xlane.xlu0 %1054
          %v1056 = vrot.slane %v1055, 4
          %v1057 = vadd.f32 %v1055, %v1056
          %v1058 = vrot.slane %v1057, 2
          %v1059 = vadd.f32 %v1057, %v1058
          %v1060 = vrot.slane %v1059, 1
          %v1061 = vadd.f32 %v1059, %v1060
          %s1062 = vtos %v1061
          %v1063 = vld [vmem:[#allocation4] sm:$0xff]
          %v1064 = vld [vmem:[#allocation4 + $0x8] sm:$0xff]
          %v1065 = vld [vmem:[#allocation4 + $0x10] sm:$0xff]
          %v1066 = vld [vmem:[#allocation4 + $0x18] sm:$0xff]
          %v1067 = vsel %vm1022, %v1063, 0.0
          %v1068 = vsel %vm1022, %v1064, 0.0
          %v1069 = vadd.f32 %v1067, %v1068
          %v1070 = vsel %vm1022, %v1065, 0.0
          %v1071 = vadd.f32 %v1069, %v1070
          %v1072 = vsel %vm1022, %v1066, 0.0
          %v1073 = vadd.f32 %v1071, %v1072
          %1074 = vadd.xlane.f32.xlu0 %v1073
          %v1075 = vpop.xlane.xlu0 %1074
          %v1076 = vrot.slane %v1075, 4
          %v1077 = vadd.f32 %v1075, %v1076
          %v1078 = vrot.slane %v1077, 2
          %v1079 = vadd.f32 %v1077, %v1078
          %v1080 = vrot.slane %v1079, 1
          %v1081 = vadd.f32 %v1079, %v1080
          %s1082 = vtos %v1081
          %s1083 = sadd.f32 %s1062, %s1082
          %s1084 = scalar_lea.smem [#allocation5], 0
          %1085 = sst [smem:[%s1084]] %s1083
          %s1086 = scalar_lea.smem [#allocation5], 1
          %1087 = sst [smem:[%s1086]] %s1062
          %s1088 = scalar_lea.smem [#allocation5], 2
          %1089 = sst [smem:[%s1088]] %s1082
        $region47: #{tpu_custom_call.1} parent=31 // pred_fallthru
          _
        // Predicated region
        $region48: #{tpu_custom_call.1} parent=31 // pred_check
          %p1090 = pneg %p101
        $region49: #{tpu_custom_call.1} parent=31 // pred_check_branch
          %1092 = sbr.rel (%p1090) target = $region51
        $region50: #{tpu_custom_call.1} parent=31 // pred_region
          %s1094 = ssub.s32 16, 16
          %1095 = vsyncadd [#allocation6], %s1094
          %1098 = dma.smem_to_hbm [#allocation5], 16, %s3, [#allocation6]
        $region51: #{tpu_custom_call.1} parent=31 // pred_fallthru
          _
        // Predicated region
        $region52: #{tpu_custom_call.1} parent=31 // pred_check
          %p1099 = pneg %p101
        $region53: #{tpu_custom_call.1} parent=31 // pred_check_branch
          %1101 = sbr.rel (%p1099) target = $region55
        $region54: #{tpu_custom_call.1} parent=31 // pred_region
          %1102 = dma.done [#allocation6], 16
        $region55: #{tpu_custom_call.1} parent=31 // pred_fallthru
          _
        %1103 = sfence
      $region32: #{tpu_custom_call.1} parent=5 // pred_fallthru
        _
      %p1104 = scmp.le.s32.totalorder 2, %s10
      // Predicated region
      $region56: #{tpu_custom_call.1} parent=5 // pred_check
        %p1105 = pneg %p1104
      $region57: #{tpu_custom_call.1} parent=5 // pred_check_branch
        %1107 = sbr.rel (%p1105) target = $region59
      $region58: #{tpu_custom_call.1} parent=5 // pred_region
        %s1108 = ssub.s32 %s10, 2
      $region59: #{tpu_custom_call.1} parent=5 // pred_fallthru
        _
    $region6: #{tpu_custom_call.1} parent=1 // loop_footer
      %s14 = sadd.s32 1, %s10
    $region7: #{tpu_custom_call.1} parent=1 // loop_footer_branch
      %9 = sbr.rel target = $region3
    $region8: #{tpu_custom_call.1} parent=1 // loop_exit
      _
    %1109 = vsyncpa [#allocation6], 1
    %s1110 = scalar_lea.sflag [#allocation6], 1
    %1111 = vsyncpa %s1110, 1

</llo_original>
